<compile_context>
chip_gen: v5e
topology: v5e:2x2
jax: 0.10.0
libtpu: 0.0.40
codegen_flags: <defaults>
</compile_context>

<pallas_src>
import jax
import jax.numpy as jnp
from jax.experimental import pallas as pl
from jax.experimental.pallas import tpu as pltpu


def _tp_mlp_kernel(x_ref, w1_ref, w2_ref, o_ref, acc_ref):
    # grid = (m, f); f (folded shard*FFN tile) is the reduction axis (innermost).
    f = pl.program_id(1)

    @pl.when(f == 0)
    def _():
        acc_ref[...] = jnp.zeros_like(acc_ref)

    # Per-FFN-tile compute: h = gelu(x @ W1'[:, f]);  acc += h @ W2'[f, :]
    # x is loaded in its storage dtype and cast to the weight dtype per tile
    # (cheap VPU op) -> bf16 operands on the MXU, f32 accumulation. gelu is
    # elementwise, so splitting the folded T*Fs axis is mathematically exact,
    # and summing the per-tile partials realizes the shard all-reduce.
    x = x_ref[...].astype(w1_ref.dtype)
    h = jnp.dot(x, w1_ref[...], preferred_element_type=jnp.float32)
    h = jax.nn.gelu(h, approximate=True)          # tanh form -> EUP slot
    acc_ref[...] += jnp.dot(h.astype(w2_ref.dtype), w2_ref[...],
                            preferred_element_type=jnp.float32)

    # "All-reduce" finalize: after summing all folded partials, emit the result
    # (what every shard returns; the module returns results[0]).
    @pl.when(f == pl.num_programs(1) - 1)
    def _():
        o_ref[...] = acc_ref[...].astype(o_ref.dtype)


def _physical_vmem_bytes():
    try:
        return int(pltpu.get_tpu_info().vmem_capacity_bytes)
    except Exception:
        return 64 * 1024 * 1024        # conservative default (v7x per-TC VMEM)


def _est_vmem_bytes(tm, tf, H, w_isz, x_isz, o_isz):
    # Double-buffered weight tiles (W1 + W2), double-buffered x/out tiles,
    # f32 accumulator, plus the compiler-materialized h intermediate (f32 + bf16).
    weights = 2 * (2 * H * tf * w_isz)
    acts = 2 * tm * H * x_isz + 2 * tm * H * o_isz + 4 * tm * H
    inter = tm * tf * (4 + w_isz)
    return weights + acts + inter


def _select_tiles(M, H, F_total, budget, w_isz, x_isz, o_isz):
    # Prefer large tm (weight re-streaming is the dominant HBM lever) and
    # 256-multiples for the 256-wide v6e/v7x MXU; tm = M for small/decode M.
    tm_cands = [c for c in (1024, 768, 512, 256, 128, 64, 32, 16, 8)
                if c <= M and M % c == 0]
    if M <= 1024:
        tm_cands = [M] + [c for c in tm_cands if c != M]
    if not tm_cands:
        tm_cands = [M]
    tf_cands = [c for c in (2048, 1536, 1024, 768, 512, 256, 128)
                if c <= F_total and F_total % c == 0]
    if not tf_cands:
        tf_cands = [F_total]
    for tm in tm_cands:
        for tf in tf_cands:
            if _est_vmem_bytes(tm, tf, H, w_isz, x_isz, o_isz) <= budget:
                return tm, tf
    return tm_cands[-1], tf_cands[-1]


def tensor_parallel_forward(x, w1_shards, w2_shards, *, tm=None, tf=None,
                            vmem_limit_bytes=None):
    """x: [M, H]; w1_shards: [T, H, Fs] (column-parallel); w2_shards: [T, Fs, H] (row-parallel).

    Weights are expected in bf16 (or any MXU-friendly dtype); x is cast to the
    weight dtype per-tile inside the kernel, accumulation stays f32, output
    keeps x.dtype.
    """
    T, H, Fs = w1_shards.shape
    M = x.shape[0]
    assert x.shape[1] == H and w2_shards.shape == (T, Fs, H)

    out_dtype = x.dtype
    w_dtype = w1_shards.dtype
    F_total = T * Fs

    # Fold the shard axis into the FFN axis (exact: the all-reduce is a sum).
    # Column j of W1' pairs with row j of W2' — both ordered shard-major.
    w1_cat = jnp.moveaxis(w1_shards, 0, 1).reshape(H, F_total)   # (H, T*Fs)
    w2_cat = w2_shards.reshape(F_total, H)                       # (T*Fs, H)

    w_isz = jnp.dtype(w_dtype).itemsize
    x_isz = jnp.dtype(x.dtype).itemsize
    o_isz = jnp.dtype(out_dtype).itemsize

    phys = _physical_vmem_bytes()
    budget = int(phys * 0.75)                # tile-selection budget (headroom)
    if vmem_limit_bytes is None:
        vmem_limit_bytes = int(phys * 0.85)  # ~54 MiB on v7x, ~109 MiB on v5e/v6e

    auto_tm, auto_tf = _select_tiles(M, H, F_total, budget, w_isz, x_isz, o_isz)
    if tm is None:
        tm = auto_tm
    if tf is None:
        tf = auto_tf
    assert M % tm == 0 and F_total % tf == 0, (
        "tm/tf must divide M / (T*Fs); pad inputs for arbitrary shapes")
    # TODO(synk): on v7x prefer M // tm >= 2 when M is large so the "parallel"
    # m axis actually shards across both TensorCores.

    grid = (M // tm, F_total // tf)

    grid_spec = pltpu.PrefetchScalarGridSpec(
        num_scalar_prefetch=0,
        grid=grid,
        in_specs=[
            # activations: per-M tile, resident across the whole f reduction
            pl.BlockSpec((tm, H), lambda m, f: (m, 0)),
            # folded weight slices (shard-spanning)
            pl.BlockSpec((H, tf), lambda m, f: (0, f)),
            pl.BlockSpec((tf, H), lambda m, f: (f, 0)),
        ],
        # output block depends only on m -> resident across the f reduction
        out_specs=pl.BlockSpec((tm, H), lambda m, f: (m, 0)),
        # per-M-tile f32 accumulator (reduction finishes before m advances)
        scratch_shapes=[pltpu.VMEM((tm, H), jnp.float32)],
    )

    num_m = M // tm
    cost = pl.CostEstimate(
        flops=4 * M * H * F_total,
        transcendentals=M * F_total,
        # weights are re-streamed once per M tile; x read / out written once.
        bytes_accessed=num_m * 2 * H * F_total * w_isz + M * H * (x_isz + o_isz),
    )

    return pl.pallas_call(
        _tp_mlp_kernel,
        out_shape=jax.ShapeDtypeStruct((M, H), out_dtype),
        grid_spec=grid_spec,
        compiler_params=pltpu.CompilerParams(
            # M tiles independent (megacore-shardable on v7x); folded shard/FFN
            # reduction axis last, marked arbitrary.
            dimension_semantics=("parallel", "arbitrary"),
            vmem_limit_bytes=vmem_limit_bytes,
        ),
        cost_estimate=cost,
    )(x, w1_cat, w2_cat)


def _reference(x, w1_shards, w2_shards, out_dtype):
    # Pure-JAX reference of the TP forward (sum of shard partials == all-reduce),
    # mirroring the kernel's precision (bf16 operands, f32 accumulation).
    xb = x.astype(w1_shards.dtype).astype(jnp.float32)
    out = jnp.zeros((x.shape[0], w2_shards.shape[-1]), jnp.float32)
    for t in range(w1_shards.shape[0]):
        h = jax.nn.gelu(xb @ w1_shards[t].astype(jnp.float32), approximate=True)
        h = h.astype(w2_shards.dtype).astype(jnp.float32)
        out = out + h @ w2_shards[t].astype(jnp.float32)
    return out.astype(out_dtype)


if __name__ == "__main__":
    # Small but tile-exercising shapes: tp_degree=2, batch=2, seq=16, hidden=128, ffn=512
    TP = 2
    B, S, H, F = 2, 16, 128, 512
    Fs = F // TP
    M = B * S

    key = jax.random.PRNGKey(0)
    kx, kw1, kw2 = jax.random.split(key, 3)

    x = jax.random.normal(kx, (B, S, H), dtype=jnp.float32)
    # Synthetic TP-sharded weights (column-parallel W1, row-parallel W2), bf16 storage.
    w1_full = jax.random.normal(kw1, (H, F), dtype=jnp.float32) * 0.05
    w2_full = jax.random.normal(kw2, (F, H), dtype=jnp.float32) * 0.05
    w1_shards = jnp.stack([w1_full[:, t * Fs:(t + 1) * Fs] for t in range(TP)]
                          ).astype(jnp.bfloat16)   # [T, H, Fs]
    w2_shards = jnp.stack([w2_full[t * Fs:(t + 1) * Fs, :] for t in range(TP)]
                          ).astype(jnp.bfloat16)   # [T, Fs, H]

    x2d = x.reshape(M, H)

    # tm=16 / tf=128 so the demo exercises both grid axes: grid = (2, 4).
    y = tensor_parallel_forward(x2d, w1_shards, w2_shards, tm=16, tf=128)
    y = jax.block_until_ready(y)

    y_ref = _reference(x2d, w1_shards, w2_shards, x2d.dtype)
    assert y.shape == (M, H)
    assert jnp.allclose(y, y_ref, atol=3e-2, rtol=3e-2), "mismatch vs reference"

    # The module returns results[0]: the (identical, all-reduced) shard output,
    # reshaped back to the input's leading dims.
    _ = y.reshape(B, S, H)

    print("KERNEL_OK")
</pallas_src>

<mosaic_0001>
module attributes {stable_mosaic.version = 11 : i64} {
  func.func @_tp_mlp_kernel(%arg0: i32, %arg1: i32, %arg2: memref<16x128xf32, #tpu.memory_space<vmem>>, %arg3: memref<128x128xbf16, #tpu.memory_space<vmem>>, %arg4: memref<128x128xbf16, #tpu.memory_space<vmem>>, %arg5: memref<16x128xf32, #tpu.memory_space<vmem>>, %arg6: memref<16x128xf32, #tpu.memory_space<vmem>>) attributes {dimension_semantics = [#tpu.dimension_semantics<parallel>, #tpu.dimension_semantics<arbitrary>], iteration_bounds = array<i64: 2, 4>, scalar_prefetch = 0 : i64, scratch_operands = 1 : i64, tpu.core_type = #tpu.core_type<tc>, window_params = [{transform_indices = @transform_0, window_bounds = array<i64: 16, 128>}, {transform_indices = @transform_1, window_bounds = array<i64: 128, 128>}, {transform_indices = @transform_2, window_bounds = array<i64: 128, 128>}, {transform_indices = @transform_3, window_bounds = array<i64: 16, 128>}]} {
    %c0_i32 = arith.constant 0 : i32
    %0 = arith.cmpi eq, %arg1, %c0_i32 : i32
    %1 = arith.extui %0 : i1 to i32
    %c0_i32_0 = arith.constant 0 : i32
    %2 = arith.cmpi ne, %1, %c0_i32_0 : i32
    scf.if %2 {
      %cst_16 = arith.constant 0.000000e+00 : f32
      %29 = vector.broadcast %cst_16 : f32 to vector<16x128xf32>
      %c0_17 = arith.constant 0 : index
      %c0_18 = arith.constant 0 : index
      %30 = vector.load %arg6[%c0_17, %c0_18] : memref<16x128xf32, #tpu.memory_space<vmem>>, vector<16x128xf32>
      tpu.vector_store %arg6[%c0_17, %c0_18], %29 {strides = array<i32>} : memref<16x128xf32, #tpu.memory_space<vmem>>, vector<16x128xf32>,
    } else {
    }
    %c0 = arith.constant 0 : index
    %c0_1 = arith.constant 0 : index
    %3 = vector.load %arg2[%c0, %c0_1] : memref<16x128xf32, #tpu.memory_space<vmem>>, vector<16x128xf32>
    %4 = arith.truncf %3 : vector<16x128xf32> to vector<16x128xbf16>
    %c0_2 = arith.constant 0 : index
    %c0_3 = arith.constant 0 : index
    %5 = vector.load %arg3[%c0_2, %c0_3] : memref<128x128xbf16, #tpu.memory_space<vmem>>, vector<128x128xbf16>
    %cst = arith.constant dense<0.000000e+00> : vector<16x128xf32>
    %6 = tpu.matmul %4, %5, %cst {dimension_numbers = #tpu.dot_dimension_numbers<[1], [0], [0], [1], [0, 0, 1, 1], [], []>} : vector<16x128xbf16>, vector<128x128xbf16>, vector<16x128xf32> -> vector<16x128xf32>
    %7 = arith.mulf %6, %6 : vector<16x128xf32>
    %8 = arith.mulf %6, %7 : vector<16x128xf32>
    %cst_4 = arith.constant 4.471500e-02 : f32
    %9 = vector.broadcast %cst_4 : f32 to vector<16x128xf32>
    %10 = arith.mulf %9, %8 : vector<16x128xf32>
    %11 = arith.addf %6, %10 : vector<16x128xf32>
    %cst_5 = arith.constant 0.797884583 : f32
    %12 = vector.broadcast %cst_5 : f32 to vector<16x128xf32>
    %13 = arith.mulf %12, %11 : vector<16x128xf32>
    %14 = math.tanh %13 : vector<16x128xf32>
    %cst_6 = arith.constant 1.000000e+00 : f32
    %15 = vector.broadcast %cst_6 : f32 to vector<16x128xf32>
    %16 = arith.addf %15, %14 : vector<16x128xf32>
    %cst_7 = arith.constant 5.000000e-01 : f32
    %17 = vector.broadcast %cst_7 : f32 to vector<16x128xf32>
    %18 = arith.mulf %17, %16 : vector<16x128xf32>
    %19 = arith.mulf %6, %18 : vector<16x128xf32>
    %c0_8 = arith.constant 0 : index
    %c0_9 = arith.constant 0 : index
    %20 = vector.load %arg6[%c0_8, %c0_9] : memref<16x128xf32, #tpu.memory_space<vmem>>, vector<16x128xf32>
    %21 = arith.truncf %19 : vector<16x128xf32> to vector<16x128xbf16>
    %c0_10 = arith.constant 0 : index
    %c0_11 = arith.constant 0 : index
    %22 = vector.load %arg4[%c0_10, %c0_11] : memref<128x128xbf16, #tpu.memory_space<vmem>>, vector<128x128xbf16>
    %cst_12 = arith.constant dense<0.000000e+00> : vector<16x128xf32>
    %23 = tpu.matmul %21, %22, %cst_12 {dimension_numbers = #tpu.dot_dimension_numbers<[1], [0], [0], [1], [0, 0, 1, 1], [], []>} : vector<16x128xbf16>, vector<128x128xbf16>, vector<16x128xf32> -> vector<16x128xf32>
    %24 = arith.addf %20, %23 : vector<16x128xf32>
    %c0_13 = arith.constant 0 : index
    %c0_14 = arith.constant 0 : index
    %25 = vector.load %arg6[%c0_13, %c0_14] : memref<16x128xf32, #tpu.memory_space<vmem>>, vector<16x128xf32>
    tpu.vector_store %arg6[%c0_13, %c0_14], %24 {strides = array<i32>} : memref<16x128xf32, #tpu.memory_space<vmem>>, vector<16x128xf32>,
    %c3_i32 = arith.constant 3 : i32
    %26 = arith.cmpi eq, %arg1, %c3_i32 : i32
    %27 = arith.extui %26 : i1 to i32
    %c0_i32_15 = arith.constant 0 : i32
    %28 = arith.cmpi ne, %27, %c0_i32_15 : i32
    scf.if %28 {
      %c0_16 = arith.constant 0 : index
      %c0_17 = arith.constant 0 : index
      %29 = vector.load %arg6[%c0_16, %c0_17] : memref<16x128xf32, #tpu.memory_space<vmem>>, vector<16x128xf32>
      %c0_18 = arith.constant 0 : index
      %c0_19 = arith.constant 0 : index
      %30 = vector.load %arg5[%c0_18, %c0_19] : memref<16x128xf32, #tpu.memory_space<vmem>>, vector<16x128xf32>
      tpu.vector_store %arg5[%c0_18, %c0_19], %29 {strides = array<i32>} : memref<16x128xf32, #tpu.memory_space<vmem>>, vector<16x128xf32>,
    } else {
    }
    return
  }
  func.func @transform_0(%arg0: i32, %arg1: i32) -> (i32, i32) {
    %c0_i32 = arith.constant 0 : i32
    %c0_i32_0 = arith.constant 0 : i32
    return %arg0, %c0_i32 : i32, i32
  }
  func.func @transform_1(%arg0: i32, %arg1: i32) -> (i32, i32) {
    %c0_i32 = arith.constant 0 : i32
    %c0_i32_0 = arith.constant 0 : i32
    return %c0_i32, %arg1 : i32, i32
  }
  func.func @transform_2(%arg0: i32, %arg1: i32) -> (i32, i32) {
    %c0_i32 = arith.constant 0 : i32
    %c0_i32_0 = arith.constant 0 : i32
    return %arg1, %c0_i32 : i32, i32
  }
  func.func @transform_3(%arg0: i32, %arg1: i32) -> (i32, i32) {
    %c0_i32 = arith.constant 0 : i32
    %c0_i32_0 = arith.constant 0 : i32
    return %arg0, %c0_i32 : i32, i32
  }
}

</mosaic_0001>

<llo_original>
// kernel: tpu_custom_call.1
$region0: #{tpu_custom_call.1}
  #allocation0 [shape = 'u32[]', space=smem, size = 0x4, offset = 0x4, fixed_abs, tag = 'smem constant byte address 0x4 - core index']
  #allocation1 [shape = 'u32[72,128]{1,0:T(1,128)}', space=vmem, size = 0x9000, scoped, tag = 'internal scratch']
  #allocation2 [shape = 'f32[16,128]{1,0:T(8,128)}', space=vmem, size = 0x2000, scoped, tag = 'scratch operand']
  %s0 = inlined_call_operand.hbm [shape: f32[32,128], index: 0, kind: input, shape index: {}]
  %s1 = inlined_call_operand.hbm [shape: bf16[128,512], index: 1, kind: input, shape index: {}]
  %s2 = inlined_call_operand.hbm [shape: bf16[512,128], index: 2, kind: input, shape index: {}]
  %s3 = inlined_call_operand.hbm [shape: f32[32,128], index: 3, kind: output, shape index: {}]
  %s4 = sld [smem:[#allocation0]]
  $region65: #{tpu_custom_call.1} parent=0
    _
  %s6 = ssub.s32 1, %s4
  %s7 = scalar_select 0, %s6, %s4
  $region1: #{tpu_custom_call.1} parent=0
    #allocation3 [shape = 'u8[16384]{0}', space=vmem, size = 0x4000, scoped, tag = 'input window, operand 0']
    #allocation4 [shape = 's32[2]{0}', space=sflag, size = 0x8, scoped, tag = 'scoped memory for tpu_custom_call.1']
    #allocation5 [shape = 's32[2]{0}', space=sflag, size = 0x8, scoped, tag = 'scoped memory for tpu_custom_call.1']
    #allocation6 [shape = 'u8[65536]{0}', space=vmem, size = 0x10000, scoped, tag = 'input window, operand 1']
    #allocation7 [shape = 's32[2]{0}', space=sflag, size = 0x8, scoped, tag = 'scoped memory for tpu_custom_call.1']
    #allocation8 [shape = 'u8[65536]{0}', space=vmem, size = 0x10000, scoped, tag = 'input window, operand 2']
    #allocation9 [shape = 'u8[16384]{0}', space=vmem, size = 0x4000, scoped, tag = 'output window, operand 0']
    %8 = vsyncpa [#allocation4], 0
    %s9 = scalar_lea.sflag [#allocation4], 1
    %10 = vsyncpa %s9, 0
    %11 = vsyncpa [#allocation7], 0
    %s12 = scalar_lea.sflag [#allocation7], 1
    %13 = vsyncpa %s12, 0
    %14 = vsyncpa [#allocation5], 0
    %s15 = scalar_lea.sflag [#allocation5], 1
    %16 = vsyncpa %s15, 0
    loop: start=0, step=1, limit=10
    $region2: #{tpu_custom_call.1} parent=1 // loop_pre_header
      _
    $region3: #{tpu_custom_call.1} parent=1 // loop_header
      %s18 = sphi 0, %s22
      %p19 = scmp.ge.s32.totalorder %s18, 10
      %s25 = sphi 0, %s37
      %s26 = sphi 0, %s33
      %s27 = sphi 0, %s25
      %s28 = sphi 0, %s26
      %s29 = sphi 0, %s27
      %s30 = sphi 0, %s28
      %s40 = sphi 0, %s42
      %s43 = sphi 0, %s40
      %s44 = sphi 0, %s43
      %s60 = sphi 0, %s44
      %s66 = sphi 0, %s68
      %s69 = sphi 0, %s66
      %s70 = sphi 0, %s69
      %s86 = sphi 0, %s70
      %s92 = sphi 0, %s94
      %s95 = sphi 0, %s92
      %s96 = sphi 0, %s95
      %s112 = sphi 0, %s96
      %s118 = sphi 0, %s120
      %s121 = sphi 0, %s118
      %s122 = sphi 0, %s121
      %s138 = sphi 0, %s122
    $region4: #{tpu_custom_call.1} parent=1 // loop_header_branch
      %21 = sbr.rel (%p19) target = $region8
    $region5: #{tpu_custom_call.1} parent=1 // loop_body
      %s23 = ssub.s32 %s18, 1
      %s24 = ssub.s32 %s18, 2
      %s31 = sadd.s32 1, %s26
      %p32 = scmp.ge.s32.totalorder %s31, 4
      %s33 = scalar_select %p32, 0, %s31
      %s34 = sadd.s32 1, %s25
      %s35 = scalar_select %p32, %s34, %s25
      %p36 = scmp.ge.s32.totalorder %s35, 2
      %s37 = scalar_select %p36, 0, %s35
      %s38 = ssub.s32 %s25, %s37
      %p39 = scmp.eq.s32.totalorder %s38, 0
      %s41 = sadd.s32 %s40, 1
      %s42 = scalar_select %p39, %s40, %s41
      %p45 = pneg %p39
      %p46 = scmp.eq.s32.totalorder %s18, 7
      %p47 = por %p45, %p46
      %p48 = scmp.ne.s32.totalorder %s40, %s43
      %p49 = scmp.eq.s32.totalorder %s18, 0
      %p50 = por %p48, %p49
      %p51 = scmp.ne.s32.totalorder %s40, %s43
      %p52 = scmp.eq.s32.totalorder %s23, 7
      %p53 = por %p51, %p52
      %p54 = scmp.ne.s32.totalorder %s43, %s44
      %p55 = scmp.eq.s32.totalorder %s23, 0
      %p56 = por %p54, %p55
      %p57 = scmp.ne.s32.totalorder %s43, %s44
      %p58 = scmp.eq.s32.totalorder %s24, 7
      %p59 = por %p57, %p58
      %p61 = scmp.ne.s32.totalorder %s44, %s60
      %p62 = scmp.eq.s32.totalorder %s24, 0
      %p63 = por %p61, %p62
      %s64 = ssub.s32 %s26, %s33
      %p65 = scmp.eq.s32.totalorder %s64, 0
      %s67 = sadd.s32 %s66, 1
      %s68 = scalar_select %p65, %s66, %s67
      %p71 = pneg %p65
      %p72 = scmp.eq.s32.totalorder %s18, 7
      %p73 = por %p71, %p72
      %p74 = scmp.ne.s32.totalorder %s66, %s69
      %p75 = scmp.eq.s32.totalorder %s18, 0
      %p76 = por %p74, %p75
      %p77 = scmp.ne.s32.totalorder %s66, %s69
      %p78 = scmp.eq.s32.totalorder %s23, 7
      %p79 = por %p77, %p78
      %p80 = scmp.ne.s32.totalorder %s69, %s70
      %p81 = scmp.eq.s32.totalorder %s23, 0
      %p82 = por %p80, %p81
      %p83 = scmp.ne.s32.totalorder %s69, %s70
      %p84 = scmp.eq.s32.totalorder %s24, 7
      %p85 = por %p83, %p84
      %p87 = scmp.ne.s32.totalorder %s70, %s86
      %p88 = scmp.eq.s32.totalorder %s24, 0
      %p89 = por %p87, %p88
      %s90 = ssub.s32 %s26, %s33
      %p91 = scmp.eq.s32.totalorder %s90, 0
      %s93 = sadd.s32 %s92, 1
      %s94 = scalar_select %p91, %s92, %s93
      %p97 = pneg %p91
      %p98 = scmp.eq.s32.totalorder %s18, 7
      %p99 = por %p97, %p98
      %p100 = scmp.ne.s32.totalorder %s92, %s95
      %p101 = scmp.eq.s32.totalorder %s18, 0
      %p102 = por %p100, %p101
      %p103 = scmp.ne.s32.totalorder %s92, %s95
      %p104 = scmp.eq.s32.totalorder %s23, 7
      %p105 = por %p103, %p104
      %p106 = scmp.ne.s32.totalorder %s95, %s96
      %p107 = scmp.eq.s32.totalorder %s23, 0
      %p108 = por %p106, %p107
      %p109 = scmp.ne.s32.totalorder %s95, %s96
      %p110 = scmp.eq.s32.totalorder %s24, 7
      %p111 = por %p109, %p110
      %p113 = scmp.ne.s32.totalorder %s96, %s112
      %p114 = scmp.eq.s32.totalorder %s24, 0
      %p115 = por %p113, %p114
      %s116 = ssub.s32 %s25, %s37
      %p117 = scmp.eq.s32.totalorder %s116, 0
      %s119 = sadd.s32 %s118, 1
      %s120 = scalar_select %p117, %s118, %s119
      %p123 = pneg %p117
      %p124 = scmp.eq.s32.totalorder %s18, 7
      %p125 = por %p123, %p124
      %p126 = scmp.ne.s32.totalorder %s118, %s121
      %p127 = scmp.eq.s32.totalorder %s18, 0
      %p128 = por %p126, %p127
      %p129 = scmp.ne.s32.totalorder %s118, %s121
      %p130 = scmp.eq.s32.totalorder %s23, 7
      %p131 = por %p129, %p130
      %p132 = scmp.ne.s32.totalorder %s121, %s122
      %p133 = scmp.eq.s32.totalorder %s23, 0
      %p134 = por %p132, %p133
      %p135 = scmp.ne.s32.totalorder %s121, %s122
      %p136 = scmp.eq.s32.totalorder %s24, 7
      %p137 = por %p135, %p136
      %p139 = scmp.ne.s32.totalorder %s122, %s138
      %p140 = scmp.eq.s32.totalorder %s24, 0
      %p141 = por %p139, %p140
      %p142 = scmp.le.s32.totalorder 1, %s18
      %p143 = scmp.lt.s32.totalorder %s18, 9
      %p144 = pnand %p142, %p143
      %p145 = pneg %p144
      // Predicated region
      $region9: #{tpu_custom_call.1} parent=5 // pred_check
        _
      $region10: #{tpu_custom_call.1} parent=5 // pred_check_branch
        %147 = sbr.rel (%p144) target = $region12
      $region11: #{tpu_custom_call.1} parent=5 // pred_region
        %s148 = ssub.s32 %s18, 1
      $region12: #{tpu_custom_call.1} parent=5 // pred_fallthru
        _
      %p149 = scmp.lt.s32.totalorder %s18, 8
      // Predicated region
      $region13: #{tpu_custom_call.1} parent=5 // pred_check
        %p150 = pneg %p149
      $region14: #{tpu_custom_call.1} parent=5 // pred_check_branch
        %152 = sbr.rel (%p150) target = $region16
      $region15: #{tpu_custom_call.1} parent=5 // pred_region
        // Predicated region
        $region17: #{tpu_custom_call.1} parent=15 // pred_check
          %p153 = pneg %p50
        $region18: #{tpu_custom_call.1} parent=15 // pred_check_branch
          %155 = sbr.rel (%p153) target = $region20
        $region19: #{tpu_custom_call.1} parent=15 // pred_region
          %s156 = sand.u32 %s40, 1
          %s157 = scalar_lea.sflag [#allocation4], %s156
          %s158 = sand.u32 %s40, 1
          %s159 = smul.addr %s158, 16
          %s160 = scalar_lea.vmem [#allocation3], %s159
          %s161 = smul.u32 2, %s25
          %163 = vsyncadd %s157, 0
          %s164 = smul.addr %s161, 8
          %s165 = scalar_lea.hbm %s0, %s164
          %s166 = sshll.u32 %s165, 4
          %s167 = int_to_ptr.hbm [resolvable:$true] %s166
          %s168 = sshll.u32 %s160, 4
          %s169 = int_to_ptr.vmem [resolvable:$true] %s168
          %174 = dma.hbm_to_vmem [thread:$0]  %s167, 256, %s169, %s157, 128, 128, 8
        $region20: #{tpu_custom_call.1} parent=15 // pred_fallthru
          _
        // Predicated region
        $region21: #{tpu_custom_call.1} parent=15 // pred_check
          %p175 = pneg %p76
        $region22: #{tpu_custom_call.1} parent=15 // pred_check_branch
          %177 = sbr.rel (%p175) target = $region24
        $region23: #{tpu_custom_call.1} parent=15 // pred_region
          %s178 = sand.u32 %s18, 1
          %s179 = scalar_lea.sflag [#allocation7], %s178
          %s180 = sand.u32 %s66, 1
          %s181 = smul.addr %s180, 64
          %s182 = scalar_lea.vmem [#allocation6], %s181
          %184 = vsyncadd %s179, 0
          %s185 = smul.addr %s26, 4
          %s186 = scalar_lea.hbm %s1, %s185
          %s187 = sshll.u32 %s186, 4
          %s188 = int_to_ptr.hbm [resolvable:$true] %s187
          %s189 = sshll.u32 %s182, 4
          %s190 = int_to_ptr.vmem [resolvable:$true] %s189
          %195 = dma.hbm_to_vmem [thread:$0]  %s188, 1024, %s190, %s179, 256, 64, 4
        $region24: #{tpu_custom_call.1} parent=15 // pred_fallthru
          _
        // Predicated region
        $region25: #{tpu_custom_call.1} parent=15 // pred_check
          %p196 = pneg %p102
        $region26: #{tpu_custom_call.1} parent=15 // pred_check_branch
          %198 = sbr.rel (%p196) target = $region28
        $region27: #{tpu_custom_call.1} parent=15 // pred_region
          %s199 = sand.u32 %s18, 1
          %s200 = scalar_lea.sflag [#allocation7], %s199
          %s201 = sand.u32 %s92, 1
          %s202 = smul.addr %s201, 64
          %s203 = scalar_lea.vmem [#allocation8], %s202
          %s204 = smul.u32 16, %s26
          %206 = vsyncadd %s200, 0
          %s207 = smul.addr %s204, 4
          %s208 = scalar_lea.hbm %s2, %s207
          %s209 = sshll.u32 %s208, 4
          %s210 = int_to_ptr.hbm [resolvable:$true] %s209
          %s211 = sshll.u32 %s203, 4
          %s212 = int_to_ptr.vmem [resolvable:$true] %s211
          %217 = dma.hbm_to_vmem [thread:$0]  %s210, 1024, %s212, %s200, 64, 64, 4
        $region28: #{tpu_custom_call.1} parent=15 // pred_fallthru
          _
      $region16: #{tpu_custom_call.1} parent=5 // pred_fallthru
        _
      %p218 = scmp.le.s32.totalorder 1, %s18
      %p219 = scmp.lt.s32.totalorder %s18, 9
      %p220 = pnand %p218, %p219
      %p221 = pneg %p220
      // Predicated region
      $region29: #{tpu_custom_call.1} parent=5 // pred_check
        _
      $region30: #{tpu_custom_call.1} parent=5 // pred_check_branch
        %223 = sbr.rel (%p220) target = $region32
      $region31: #{tpu_custom_call.1} parent=5 // pred_region
        %s224 = ssub.s32 %s18, 1
        %s225 = sand.u32 %s43, 1
        %s226 = scalar_lea.sflag [#allocation4], %s225
        %s227 = sand.u32 %s43, 1
        %s228 = smul.addr %s227, 16
        %s229 = scalar_lea.vmem [#allocation3], %s228
        // Predicated region
        $region33: #{tpu_custom_call.1} parent=31 // pred_check
          %p230 = pneg %p56
        $region34: #{tpu_custom_call.1} parent=31 // pred_check_branch
          %232 = sbr.rel (%p230) target = $region36
        $region35: #{tpu_custom_call.1} parent=31 // pred_region
          %234 = dma.done %s226, 256
        $region36: #{tpu_custom_call.1} parent=31 // pred_fallthru
          _
        %s235 = sand.u32 %s23, 1
        %s236 = scalar_lea.sflag [#allocation7], %s235
        %s237 = sand.u32 %s69, 1
        %s238 = smul.addr %s237, 64
        %s239 = scalar_lea.vmem [#allocation6], %s238
        // Predicated region
        $region37: #{tpu_custom_call.1} parent=31 // pred_check
          %p240 = pneg %p82
        $region38: #{tpu_custom_call.1} parent=31 // pred_check_branch
          %242 = sbr.rel (%p240) target = $region40
        $region39: #{tpu_custom_call.1} parent=31 // pred_region
          %244 = dma.done %s236, 1024
        $region40: #{tpu_custom_call.1} parent=31 // pred_fallthru
          _
        %s245 = sand.u32 %s23, 1
        %s246 = scalar_lea.sflag [#allocation7], %s245
        %s247 = sand.u32 %s95, 1
        %s248 = smul.addr %s247, 64
        %s249 = scalar_lea.vmem [#allocation8], %s248
        // Predicated region
        $region41: #{tpu_custom_call.1} parent=31 // pred_check
          %p250 = pneg %p108
        $region42: #{tpu_custom_call.1} parent=31 // pred_check_branch
          %252 = sbr.rel (%p250) target = $region44
        $region43: #{tpu_custom_call.1} parent=31 // pred_region
          %254 = dma.done %s246, 1024
        $region44: #{tpu_custom_call.1} parent=31 // pred_fallthru
          _
        %s255 = sand.u32 %s43, 1
        %s256 = scalar_lea.sflag [#allocation4], %s255
        %s257 = sand.u32 %s43, 1
        %s258 = smul.addr %s257, 16
        %s259 = scalar_lea.vmem [#allocation3], %s258
        %p260 = pneg %p56
        %p261 = pneg %p53
        %s262 = sand.u32 %s23, 1
        %s263 = scalar_lea.sflag [#allocation7], %s262
        %s264 = sand.u32 %s69, 1
        %s265 = smul.addr %s264, 64
        %s266 = scalar_lea.vmem [#allocation6], %s265
        %p267 = pneg %p82
        %p268 = pneg %p79
        %s269 = sand.u32 %s23, 1
        %s270 = scalar_lea.sflag [#allocation7], %s269
        %s271 = sand.u32 %s95, 1
        %s272 = smul.addr %s271, 64
        %s273 = scalar_lea.vmem [#allocation8], %s272
        %p274 = pneg %p108
        %p275 = pneg %p105
        %p276 = pneg %p134
        %p277 = pneg %p131
        %s278 = sand.u32 %s121, 1
        %s279 = scalar_lea.sflag [#allocation5], %s278
        %s280 = sand.u32 %s121, 1
        %s281 = smul.addr %s280, 16
        %s282 = scalar_lea.vmem [#allocation9], %s281
        %s283 = smul.u32 2, %s27
        %s284 = smul.u32 16, %s28
        %s285 = smul.u32 2, %s27
        %p286 = scmp.eq.s32.totalorder %s28, 0
        // Predicated region
        $region45: #{tpu_custom_call.1} parent=31 // pred_check
          %p287 = pneg %p286
        $region46: #{tpu_custom_call.1} parent=31 // pred_check_branch
          %289 = sbr.rel (%p287) target = $region48
        $region47: #{tpu_custom_call.1} parent=31 // pred_region
          %290 = vst [vmem:[#allocation2] sm:$0xff] 0.0
          %291 = vst [vmem:[#allocation2 + $0x8] sm:$0xff] 0.0
        $region48: #{tpu_custom_call.1} parent=31 // pred_fallthru
          _
        %v292 = vld [vmem:[%s229] sm:$0xff]
        %v293 = vld [vmem:[%s229 + $0x8] sm:$0xff]
        %v294 = vpack.c.bf16 %v293, %v292
        %v295 = vld [vmem:[%s239] sm:$0xf]
        %v296 = vld [vmem:[%s239 + $0x4] sm:$0xf]
        %v297 = vld [vmem:[%s239 + $0x8] sm:$0xf]
        %v298 = vld [vmem:[%s239 + $0xc] sm:$0xf]
        %v299 = vld [vmem:[%s239 + $0x10] sm:$0xf]
        %v300 = vld [vmem:[%s239 + $0x14] sm:$0xf]
        %v301 = vld [vmem:[%s239 + $0x18] sm:$0xf]
        %v302 = vld [vmem:[%s239 + $0x1c] sm:$0xf]
        %v303 = vld [vmem:[%s239 + $0x20] sm:$0xf]
        %v304 = vld [vmem:[%s239 + $0x24] sm:$0xf]
        %v305 = vld [vmem:[%s239 + $0x28] sm:$0xf]
        %v306 = vld [vmem:[%s239 + $0x2c] sm:$0xf]
        %v307 = vld [vmem:[%s239 + $0x30] sm:$0xf]
        %v308 = vld [vmem:[%s239 + $0x34] sm:$0xf]
        %v309 = vld [vmem:[%s239 + $0x38] sm:$0xf]
        %v310 = vld [vmem:[%s239 + $0x3c] sm:$0xf]
        %v327 = vunpack.c.l.b16 %v295
        %v328 = vunpack.c.l.b16 %v296
        %v329 = vunpack.c.l.b16 %v297
        %v330 = vunpack.c.l.b16 %v298
        %v331 = vunpack.c.l.b16 %v299
        %v332 = vunpack.c.l.b16 %v300
        %v333 = vunpack.c.l.b16 %v301
        %v334 = vunpack.c.l.b16 %v302
        %v335 = vunpack.c.l.b16 %v303
        %v336 = vunpack.c.l.b16 %v304
        %v337 = vunpack.c.l.b16 %v305
        %v338 = vunpack.c.l.b16 %v306
        %v339 = vunpack.c.l.b16 %v307
        %v340 = vunpack.c.l.b16 %v308
        %v341 = vunpack.c.l.b16 %v309
        %v342 = vunpack.c.l.b16 %v310
        %v343 = vpack.c.b16 %v328, %v327
        %v344 = vpack.c.b16 %v330, %v329
        %v345 = vpack.c.b16 %v332, %v331
        %v346 = vpack.c.b16 %v334, %v333
        %v347 = vpack.c.b16 %v336, %v335
        %v348 = vpack.c.b16 %v338, %v337
        %v349 = vpack.c.b16 %v340, %v339
        %v350 = vpack.c.b16 %v342, %v341
        %359 = vmatpush.bf16.msra.mxu0 %v350
        %360 = vmatpush.bf16.msra.mxu0 %v349
        %361 = vmatpush.bf16.msra.mxu0 %v348
        %362 = vmatpush.bf16.msra.mxu0 %v347
        %363 = vmatpush.bf16.msra.mxu0 %v346
        %364 = vmatpush.bf16.msra.mxu0 %v345
        %365 = vmatpush.bf16.msra.mxu0 %v344
        %366 = vmatpush.bf16.msra.mxu0 %v343
        %367 = vmatmul.bf16.gmra.mxu0 %v294
        %v368 = vpop.f32.mrf.mxu0
        %v369 = vadd.f32 0.0, %v368
        %v370 = vpop.f32.mrf.mxu0
        %v371 = vadd.f32 0.0, %v370
        %372 = vdwg.mxu0
        %v373 = vmul.f32 %v369, %v369
        %v374 = vmul.f32 %v371, %v371
        %v375 = vmul.f32 %v369, %v373
        %v376 = vmul.f32 %v371, %v374
        %v377 = vmul.f32 %v375, 0.044715
        %v378 = vmul.f32 %v376, 0.044715
        %v379 = vadd.f32 %v369, %v377
        %v380 = vadd.f32 %v371, %v378
        %v381 = vmul.f32 %v379, 0.7978846
        %v382 = vmul.f32 %v380, 0.7978846
        %v383 = vtanh.pop %v381
        %v384 = vtanh.pop %v382
        %v385 = vadd.f32 %v383, 1.0
        %v386 = vadd.f32 %v384, 1.0
        %v387 = vmul.f32 %v385, 0.5
        %v388 = vmul.f32 %v386, 0.5
        %v389 = vmul.f32 %v369, %v387
        %v390 = vmul.f32 %v371, %v388
        %v391 = vld [vmem:[#allocation2] sm:$0xff]
        %v392 = vld [vmem:[#allocation2 + $0x8] sm:$0xff]
        %v393 = vpack.c.bf16 %v390, %v389
        %v394 = vld [vmem:[%s249] sm:$0xf]
        %v395 = vld [vmem:[%s249 + $0x4] sm:$0xf]
        %v396 = vld [vmem:[%s249 + $0x8] sm:$0xf]
        %v397 = vld [vmem:[%s249 + $0xc] sm:$0xf]
        %v398 = vld [vmem:[%s249 + $0x10] sm:$0xf]
        %v399 = vld [vmem:[%s249 + $0x14] sm:$0xf]
        %v400 = vld [vmem:[%s249 + $0x18] sm:$0xf]
        %v401 = vld [vmem:[%s249 + $0x1c] sm:$0xf]
        %v402 = vld [vmem:[%s249 + $0x20] sm:$0xf]
        %v403 = vld [vmem:[%s249 + $0x24] sm:$0xf]
        %v404 = vld [vmem:[%s249 + $0x28] sm:$0xf]
        %v405 = vld [vmem:[%s249 + $0x2c] sm:$0xf]
        %v406 = vld [vmem:[%s249 + $0x30] sm:$0xf]
        %v407 = vld [vmem:[%s249 + $0x34] sm:$0xf]
        %v408 = vld [vmem:[%s249 + $0x38] sm:$0xf]
        %v409 = vld [vmem:[%s249 + $0x3c] sm:$0xf]
        %v426 = vunpack.c.l.b16 %v394
        %v427 = vunpack.c.l.b16 %v395
        %v428 = vunpack.c.l.b16 %v396
        %v429 = vunpack.c.l.b16 %v397
        %v430 = vunpack.c.l.b16 %v398
        %v431 = vunpack.c.l.b16 %v399
        %v432 = vunpack.c.l.b16 %v400
        %v433 = vunpack.c.l.b16 %v401
        %v434 = vunpack.c.l.b16 %v402
        %v435 = vunpack.c.l.b16 %v403
        %v436 = vunpack.c.l.b16 %v404
        %v437 = vunpack.c.l.b16 %v405
        %v438 = vunpack.c.l.b16 %v406
        %v439 = vunpack.c.l.b16 %v407
        %v440 = vunpack.c.l.b16 %v408
        %v441 = vunpack.c.l.b16 %v409
        %v442 = vpack.c.b16 %v427, %v426
        %v443 = vpack.c.b16 %v429, %v428
        %v444 = vpack.c.b16 %v431, %v430
        %v445 = vpack.c.b16 %v433, %v432
        %v446 = vpack.c.b16 %v435, %v434
        %v447 = vpack.c.b16 %v437, %v436
        %v448 = vpack.c.b16 %v439, %v438
        %v449 = vpack.c.b16 %v441, %v440
        %458 = vmatpush.bf16.msra.mxu0 %v449
        %459 = vmatpush.bf16.msra.mxu0 %v448
        %460 = vmatpush.bf16.msra.mxu0 %v447
        %461 = vmatpush.bf16.msra.mxu0 %v446
        %462 = vmatpush.bf16.msra.mxu0 %v445
        %463 = vmatpush.bf16.msra.mxu0 %v444
        %464 = vmatpush.bf16.msra.mxu0 %v443
        %465 = vmatpush.bf16.msra.mxu0 %v442
        %466 = vmatmul.bf16.gmra.mxu0 %v393
        %v467 = vpop.f32.mrf.mxu0
        %v468 = vadd.f32 0.0, %v467
        %v469 = vpop.f32.mrf.mxu0
        %v470 = vadd.f32 0.0, %v469
        %471 = vdwg.mxu0
        %v472 = vadd.f32 %v391, %v468
        %v473 = vadd.f32 %v392, %v470
        %474 = vst [vmem:[#allocation2] sm:$0xff] %v472
        %475 = vst [vmem:[#allocation2 + $0x8] sm:$0xff] %v473
        %p476 = scmp.eq.s32.totalorder %s28, 3
        // Predicated region
        $region49: #{tpu_custom_call.1} parent=31 // pred_check
          %p477 = pneg %p476
        $region50: #{tpu_custom_call.1} parent=31 // pred_check_branch
          %479 = sbr.rel (%p477) target = $region52
        $region51: #{tpu_custom_call.1} parent=31 // pred_region
          %v480 = vld [vmem:[#allocation2] sm:$0xff]
          %v481 = vld [vmem:[#allocation2 + $0x8] sm:$0xff]
          %482 = vst [vmem:[%s282] sm:$0xff] %v480
          %483 = vst [vmem:[%s282 + $0x8] sm:$0xff] %v481
        $region52: #{tpu_custom_call.1} parent=31 // pred_fallthru
          _
        %s484 = sand.u32 %s121, 1
        %s485 = scalar_lea.sflag [#allocation5], %s484
        %s486 = sand.u32 %s121, 1
        %s487 = smul.addr %s486, 16
        %s488 = scalar_lea.vmem [#allocation9], %s487
        // Predicated region
        $region53: #{tpu_custom_call.1} parent=31 // pred_check
          %p489 = pneg %p131
        $region54: #{tpu_custom_call.1} parent=31 // pred_check_branch
          %491 = sbr.rel (%p489) target = $region56
        $region55: #{tpu_custom_call.1} parent=31 // pred_region
          %s492 = smul.u32 2, %s27
          %494 = vsyncadd %s485, 0
          %s495 = smul.addr %s492, 8
          %s496 = scalar_lea.hbm %s3, %s495
          %s497 = sshll.u32 %s488, 4
          %s498 = int_to_ptr.vmem [resolvable:$true] %s497
          %s499 = sshll.u32 %s496, 4
          %s500 = int_to_ptr.hbm [resolvable:$true] %s499
          %505 = dma.vmem_to_hbm [thread:$0]  %s498, 256, %s500, %s485, 128, 128, 8
        $region56: #{tpu_custom_call.1} parent=31 // pred_fallthru
          _
      $region32: #{tpu_custom_call.1} parent=5 // pred_fallthru
        _
      %p506 = scmp.le.s32.totalorder 2, %s18
      // Predicated region
      $region57: #{tpu_custom_call.1} parent=5 // pred_check
        %p507 = pneg %p506
      $region58: #{tpu_custom_call.1} parent=5 // pred_check_branch
        %509 = sbr.rel (%p507) target = $region60
      $region59: #{tpu_custom_call.1} parent=5 // pred_region
        %s510 = ssub.s32 %s18, 2
        // Predicated region
        $region61: #{tpu_custom_call.1} parent=59 // pred_check
          %p511 = pneg %p137
        $region62: #{tpu_custom_call.1} parent=59 // pred_check_branch
          %513 = sbr.rel (%p511) target = $region64
        $region63: #{tpu_custom_call.1} parent=59 // pred_region
          %s514 = sand.u32 %s122, 1
          %s515 = scalar_lea.sflag [#allocation5], %s514
          %s516 = sand.u32 %s122, 1
          %s517 = smul.addr %s516, 16
          %s518 = scalar_lea.vmem [#allocation9], %s517
          %520 = dma.done %s515, 256
        $region64: #{tpu_custom_call.1} parent=59 // pred_fallthru
          _
      $region60: #{tpu_custom_call.1} parent=5 // pred_fallthru
        _
    $region6: #{tpu_custom_call.1} parent=1 // loop_footer
      %s22 = sadd.s32 1, %s18
    $region7: #{tpu_custom_call.1} parent=1 // loop_footer_branch
      %17 = sbr.rel target = $region3
    $region8: #{tpu_custom_call.1} parent=1 // loop_exit
      _
    %521 = vsyncpa [#allocation4], 1
    %s522 = scalar_lea.sflag [#allocation4], 1
    %523 = vsyncpa %s522, 1
    %524 = vsyncpa [#allocation7], 1
    %s525 = scalar_lea.sflag [#allocation7], 1
    %526 = vsyncpa %s525, 1
    %527 = vsyncpa [#allocation5], 1
    %s528 = scalar_lea.sflag [#allocation5], 1
    %529 = vsyncpa %s528, 1

</llo_original>
